<compile_context>
chip_gen: v6e
topology: v6e:2x2x1
jax: 0.10.0
libtpu: 0.0.40
codegen_flags: <defaults>
</compile_context>

<pallas_src>
import jax
import jax.numpy as jnp
from jax.experimental import pallas as pl
from jax.experimental.pallas import tpu as pltpu


def _round_up(x, m):
    return (x + m - 1) // m * m


def _band_weights(w_hwio, W):
    """Per-ky banded matrices B: (K, W*Cin, W*Cout) with
       B[ky, wi*Cin+ci, wo*Cout+co] = w_hwio[ky, wi-wo+pad, ci, co] (0 outside),
       realizing a KxK 'same' conv along the folded width axis."""
    K, _, Ci, Co = w_hwio.shape
    pad = K // 2
    wi = jnp.arange(W)[:, None]                    # input (source) column
    wo = jnp.arange(W)[None, :]                    # output column
    kx = wi - wo + pad                             # (W, W)
    valid = ((kx >= 0) & (kx < K)).astype(w_hwio.dtype)
    kxc = jnp.clip(kx, 0, K - 1)
    blocks = w_hwio[:, kxc] * valid[None, :, :, None, None]   # (K, W, W, Ci, Co)
    return blocks.transpose(0, 1, 3, 2, 4).reshape(K, W * Ci, W * Co)


def fold_conv_block_params(w1_oihw, b1, w2_oihw, b2, W,
                           compute_dtype=jnp.bfloat16):
    """Precompute width-folded banded weights + biases.  Hoisted out of the
    per-forward path: call once per weight update (PyTorch layouts in)."""
    Cmid, Cin = w1_oihw.shape[0], w1_oihw.shape[1]
    Cout = w2_oihw.shape[0]
    wc_in = W * Cin
    # Lane-pad the *folded* dims directly to the next multiple of 128
    # (unmasked lane-dense stores; waste bounded by < 128 lanes).
    wc_mid = _round_up(W * Cmid, 128)
    wc_out = _round_up(W * Cout, 128)

    w1_hwio = jnp.transpose(w1_oihw, (2, 3, 1, 0)).astype(jnp.float32)   # (3,3,Cin,Cmid)
    w2_hwio = jnp.transpose(w2_oihw, (2, 3, 1, 0)).astype(jnp.float32)   # (3,3,Cmid,Cout)
    B1 = _band_weights(w1_hwio, W)                                       # (3, W*Cin,  W*Cmid)
    B2 = _band_weights(w2_hwio, W)                                       # (3, W*Cmid, W*Cout)
    B1 = jnp.pad(B1, ((0, 0), (0, 0), (0, wc_mid - W * Cmid))).astype(compute_dtype)
    B2 = jnp.pad(B2, ((0, 0), (0, wc_mid - W * Cmid),
                      (0, wc_out - W * Cout))).astype(compute_dtype)
    b1f = jnp.pad(jnp.tile(b1.astype(jnp.float32), W),
                  (0, wc_mid - W * Cmid)).reshape(1, wc_mid)
    b2f = jnp.pad(jnp.tile(b2.astype(jnp.float32), W),
                  (0, wc_out - W * Cout)).reshape(1, wc_out)
    return dict(B1=B1, b1=b1f, B2=B2, b2=b2f, W=W, Cin=Cin, Cmid=Cmid,
                Cout=Cout, wc_in=wc_in, wc_mid=wc_mid, wc_out=wc_out,
                compute_dtype=compute_dtype)


def _make_fused_convblock(rows_step, wc_in, wc_mid, wc_out, n_steps,
                          compute_dtype, out_dtype):
    """Fused ConvRelu -> ConvRelu over a stacked, halo-padded row axis."""
    M = rows_step - 2   # rows of conv output produced per grid step

    def kernel(x_ref, w1_ref, b1_ref, w2_ref, b2_ref, mask_ref, o_ref, x2_ref):
        # ---- conv1: 3 banded MXU matmuls over the pre-padded row stack ------
        acc1 = jnp.zeros((M, wc_mid), jnp.float32)
        for ky in range(3):
            acc1 = acc1 + jnp.dot(x_ref[ky:ky + M, :], w1_ref[ky],
                                  preferred_element_type=jnp.float32)
        # f32 bias + ReLU epilogue; seam mask zeroes rows that straddle image
        # boundaries so they become conv2's zero halo rows.
        y1 = jnp.maximum(acc1 + b1_ref[...], 0.0) * mask_ref[...]

        # ---- conv2: intermediate never leaves VMEM (bf16 scratch, 1 cast) ---
        x2_ref[0:1, :] = jnp.zeros((1, wc_mid), compute_dtype)
        x2_ref[rows_step - 1:rows_step, :] = jnp.zeros((1, wc_mid), compute_dtype)
        x2_ref[1:rows_step - 1, :] = y1.astype(compute_dtype)

        acc2 = jnp.zeros((M, wc_out), jnp.float32)
        for ky in range(3):
            acc2 = acc2 + jnp.dot(x2_ref[ky:ky + M, :], w2_ref[ky],
                                  preferred_element_type=jnp.float32)
        # lane-dense (multiple-of-128) output store
        o_ref[0:M, :] = jnp.maximum(acc2 + b2_ref[...], 0.0).astype(out_dtype)
        o_ref[M:rows_step, :] = jnp.zeros((2, wc_out), out_dtype)

    # Constants live whole-array in VMEM: single-buffered, no per-step re-DMA.
    vmem_const = pl.BlockSpec(memory_space=pltpu.MemorySpace.VMEM)

    return pl.pallas_call(
        kernel,
        out_shape=jax.ShapeDtypeStruct((n_steps * rows_step, wc_out), out_dtype),
        grid_spec=pltpu.PrefetchScalarGridSpec(
            num_scalar_prefetch=0,
            grid=(n_steps,),
            in_specs=[
                pl.BlockSpec((rows_step, wc_in), lambda n: (n, 0)),  # activations
                vmem_const,   # B1   (3, wc_in,  wc_mid)
                vmem_const,   # b1   (1, wc_mid)
                vmem_const,   # B2   (3, wc_mid, wc_out)
                vmem_const,   # b2   (1, wc_out)
                vmem_const,   # seam mask (M, 1)
            ],
            out_specs=pl.BlockSpec((rows_step, wc_out), lambda n: (n, 0)),
            scratch_shapes=[
                pltpu.VMEM((rows_step, wc_mid), compute_dtype),  # halo'd intermediate
            ],
        ),
        compiler_params=pltpu.CompilerParams(
            dimension_semantics=("parallel",),     # megacore / v7x 2-TC sharding
            vmem_limit_bytes=64 * 1024 * 1024,     # explicit budget (v7x = 64 MiB)
        ),
    )


def conv_block_apply(x_nchw, params, *, row_tile_target=256,
                     out_dtype=jnp.float32):
    """ConvBlock forward on NCHW input using precomputed folded params."""
    N, Cin, H, W = x_nchw.shape
    assert Cin == params["Cin"] and W == params["W"]
    cdt = params["compute_dtype"]
    wc_in, wc_mid, wc_out = params["wc_in"], params["wc_mid"], params["wc_out"]
    Cout = params["Cout"]

    Hp = H + 2                                # per-image stride incl. halo rows
    ALIGN = 16                                # sublane alignment for bf16 blocks
    g = max(1, min(N, row_tile_target // Hp))  # images per grid step
    if N >= 2:
        g = min(g, (N + 1) // 2)              # keep >= 2 grid steps (v7x: 2 TCs)
    n_steps = -(-N // g)
    N_pad = n_steps * g
    rows_step = _round_up(g * Hp, ALIGN)
    pad_rows = rows_step - g * Hp
    M = rows_step - 2

    # NCHW -> NHWC, add per-image H halo, fold (W, C) onto the lane axis,
    # stack the whole batch on the row axis, pad each chunk to ALIGN rows.
    x = jnp.transpose(x_nchw, (0, 2, 3, 1))                          # (N,H,W,C)
    x = jnp.pad(x, ((0, N_pad - N), (1, 1), (0, 0), (0, 0)))         # (N_pad,Hp,W,C)
    x = x.reshape(N_pad, Hp, wc_in).reshape(n_steps, g * Hp, wc_in)
    x = jnp.pad(x, ((0, 0), (0, pad_rows), (0, 0)))
    x = x.reshape(n_steps * rows_step, wc_in).astype(cdt)

    # Conv-output rows whose 3x3 window straddles an image seam are zeroed so
    # they become the zero halos of the second conv.
    r = jnp.arange(M, dtype=jnp.int32)
    seam_mask = ((r % Hp) < H).astype(jnp.float32).reshape(M, 1)

    fwd = _make_fused_convblock(rows_step, wc_in, wc_mid, wc_out, n_steps,
                                cdt, out_dtype)
    y = fwd(x, params["B1"], params["b1"], params["B2"], params["b2"], seam_mask)

    # Unstack, drop halo/pad rows and lane padding, back to NCHW.
    y = y.reshape(n_steps, rows_step, wc_out)[:, :g * Hp, :]
    y = y.reshape(N_pad, Hp, wc_out)[:N, :H, :W * Cout]
    y = y.reshape(N, H, W, Cout).astype(jnp.float32)
    return jnp.transpose(y, (0, 3, 1, 2))


if __name__ == "__main__":
    key = jax.random.PRNGKey(0)
    k_x, k_w1, k_b1, k_w2, k_b2 = jax.random.split(key, 5)

    # ConvBlock(in_channels=4, middle_channels=8, out_channels=4)
    N, Cin, H, W = 2, 4, 16, 16
    Cmid, Cout = 8, 4

    x = jax.random.normal(k_x, (N, Cin, H, W), jnp.float32)                  # NCHW
    w1 = jax.random.normal(k_w1, (Cmid, Cin, 3, 3), jnp.float32) * 0.1       # Conv2d OIHW
    b1 = jax.random.normal(k_b1, (Cmid,), jnp.float32) * 0.1
    w2 = jax.random.normal(k_w2, (Cout, Cmid, 3, 3), jnp.float32) * 0.1      # Conv2d OIHW
    b2 = jax.random.normal(k_b2, (Cout,), jnp.float32) * 0.1

    # Banded-weight folding runs once (hoisted out of the forward path).
    params = fold_conv_block_params(w1, b1, w2, b2, W)
    y = conv_block_apply(x, params)
    y = jax.block_until_ready(y)
    assert y.shape == (N, Cout, H, W), y.shape

    # Independent XLA reference with the same bf16 operand casts (f32 accum),
    # matching the PyTorch module: ReLU(conv3x3(ReLU(conv3x3(x)))).
    x_nhwc = jnp.transpose(x, (0, 2, 3, 1)).astype(jnp.bfloat16)
    w1_ref = jnp.transpose(w1, (2, 3, 1, 0)).astype(jnp.bfloat16)
    w2_ref = jnp.transpose(w2, (2, 3, 1, 0)).astype(jnp.bfloat16)
    ref1 = jax.nn.relu(jax.lax.conv_general_dilated(
        x_nhwc, w1_ref, (1, 1), ((1, 1), (1, 1)),
        dimension_numbers=('NHWC', 'HWIO', 'NHWC'),
        preferred_element_type=jnp.float32) + b1)
    ref2 = jax.nn.relu(jax.lax.conv_general_dilated(
        ref1.astype(jnp.bfloat16), w2_ref, (1, 1), ((1, 1), (1, 1)),
        dimension_numbers=('NHWC', 'HWIO', 'NHWC'),
        preferred_element_type=jnp.float32) + b2)
    ref = jnp.transpose(ref2, (0, 3, 1, 2))

    err = float(jnp.max(jnp.abs(y - ref)))
    assert jnp.allclose(y, ref, atol=2e-3, rtol=2e-3), err

    print("KERNEL_OK")
</pallas_src>

<mosaic_0001>
module attributes {stable_mosaic.version = 11 : i64} {
  func.func @kernel(%arg0: i32, %arg1: memref<32x64xbf16, #tpu.memory_space<vmem>>, %arg2: memref<3x64x128xbf16, #tpu.memory_space<vmem>>, %arg3: memref<1x128xf32, #tpu.memory_space<vmem>>, %arg4: memref<3x128x128xbf16, #tpu.memory_space<vmem>>, %arg5: memref<1x128xf32, #tpu.memory_space<vmem>>, %arg6: memref<30x1xf32, #tpu.memory_space<vmem>>, %arg7: memref<32x128xf32, #tpu.memory_space<vmem>>, %arg8: memref<32x128xbf16, #tpu.memory_space<vmem>>) attributes {dimension_semantics = [#tpu.dimension_semantics<parallel>], iteration_bounds = array<i64: 2>, scalar_prefetch = 0 : i64, scratch_operands = 1 : i64, tpu.core_type = #tpu.core_type<tc>, window_params = [{transform_indices = @transform_0, window_bounds = array<i64: 32, 64>}, {pipeline_mode = #tpu.pipeline_mode<synchronous>, transform_indices = @transform_1, window_bounds = array<i64: 3, 64, 128>}, {pipeline_mode = #tpu.pipeline_mode<synchronous>, transform_indices = @transform_2, window_bounds = array<i64: 1, 128>}, {pipeline_mode = #tpu.pipeline_mode<synchronous>, transform_indices = @transform_3, window_bounds = array<i64: 3, 128, 128>}, {pipeline_mode = #tpu.pipeline_mode<synchronous>, transform_indices = @transform_4, window_bounds = array<i64: 1, 128>}, {pipeline_mode = #tpu.pipeline_mode<synchronous>, transform_indices = @transform_5, window_bounds = array<i64: 30, 1>}, {transform_indices = @transform_6, window_bounds = array<i64: 32, 128>}]} {
    %cst = arith.constant 0.000000e+00 : f32
    %0 = vector.broadcast %cst : f32 to vector<30x128xf32>
    %c0 = arith.constant 0 : index
    %c0_0 = arith.constant 0 : index
    %1 = vector.load %arg1[%c0, %c0_0] : memref<32x64xbf16, #tpu.memory_space<vmem>>, vector<30x64xbf16>
    %c0_1 = arith.constant 0 : index
    %c0_2 = arith.constant 0 : index
    %c0_3 = arith.constant 0 : index
    %2 = vector.load %arg2[%c0_1, %c0_2, %c0_3] : memref<3x64x128xbf16, #tpu.memory_space<vmem>>, vector<1x64x128xbf16>
    %3 = vector.shape_cast %2 : vector<1x64x128xbf16> to vector<64x128xbf16>
    %cst_4 = arith.constant dense<0.000000e+00> : vector<30x128xf32>
    %4 = tpu.matmul %1, %3, %cst_4 {dimension_numbers = #tpu.dot_dimension_numbers<[1], [0], [0], [1], [0, 0, 1, 1], [], []>} : vector<30x64xbf16>, vector<64x128xbf16>, vector<30x128xf32> -> vector<30x128xf32>
    %5 = arith.addf %0, %4 : vector<30x128xf32>
    %c1 = arith.constant 1 : index
    %c0_5 = arith.constant 0 : index
    %6 = vector.load %arg1[%c1, %c0_5] : memref<32x64xbf16, #tpu.memory_space<vmem>>, vector<30x64xbf16>
    %c1_6 = arith.constant 1 : index
    %c0_7 = arith.constant 0 : index
    %c0_8 = arith.constant 0 : index
    %7 = vector.load %arg2[%c1_6, %c0_7, %c0_8] : memref<3x64x128xbf16, #tpu.memory_space<vmem>>, vector<1x64x128xbf16>
    %8 = vector.shape_cast %7 : vector<1x64x128xbf16> to vector<64x128xbf16>
    %cst_9 = arith.constant dense<0.000000e+00> : vector<30x128xf32>
    %9 = tpu.matmul %6, %8, %cst_9 {dimension_numbers = #tpu.dot_dimension_numbers<[1], [0], [0], [1], [0, 0, 1, 1], [], []>} : vector<30x64xbf16>, vector<64x128xbf16>, vector<30x128xf32> -> vector<30x128xf32>
    %10 = arith.addf %5, %9 : vector<30x128xf32>
    %c2 = arith.constant 2 : index
    %c0_10 = arith.constant 0 : index
    %11 = vector.load %arg1[%c2, %c0_10] : memref<32x64xbf16, #tpu.memory_space<vmem>>, vector<30x64xbf16>
    %c2_11 = arith.constant 2 : index
    %c0_12 = arith.constant 0 : index
    %c0_13 = arith.constant 0 : index
    %12 = vector.load %arg2[%c2_11, %c0_12, %c0_13] : memref<3x64x128xbf16, #tpu.memory_space<vmem>>, vector<1x64x128xbf16>
    %13 = vector.shape_cast %12 : vector<1x64x128xbf16> to vector<64x128xbf16>
    %cst_14 = arith.constant dense<0.000000e+00> : vector<30x128xf32>
    %14 = tpu.matmul %11, %13, %cst_14 {dimension_numbers = #tpu.dot_dimension_numbers<[1], [0], [0], [1], [0, 0, 1, 1], [], []>} : vector<30x64xbf16>, vector<64x128xbf16>, vector<30x128xf32> -> vector<30x128xf32>
    %15 = arith.addf %10, %14 : vector<30x128xf32>
    %c0_15 = arith.constant 0 : index
    %c0_16 = arith.constant 0 : index
    %16 = vector.load %arg3[%c0_15, %c0_16] : memref<1x128xf32, #tpu.memory_space<vmem>>, vector<1x128xf32>
    %17 = vector.broadcast %16 : vector<1x128xf32> to vector<30x128xf32>
    %18 = arith.addf %15, %17 : vector<30x128xf32>
    %cst_17 = arith.constant 0.000000e+00 : f32
    %19 = vector.broadcast %cst_17 : f32 to vector<30x128xf32>
    %20 = arith.maximumf %18, %19 : vector<30x128xf32>
    %c0_18 = arith.constant 0 : index
    %c0_19 = arith.constant 0 : index
    %21 = vector.load %arg6[%c0_18, %c0_19] : memref<30x1xf32, #tpu.memory_space<vmem>>, vector<30x1xf32>
    %22 = vector.broadcast %21 : vector<30x1xf32> to vector<30x128xf32>
    %23 = arith.mulf %20, %22 : vector<30x128xf32>
    %cst_20 = arith.constant 0.000000e+00 : bf16
    %24 = vector.broadcast %cst_20 : bf16 to vector<1x128xbf16>
    %c0_21 = arith.constant 0 : index
    %c0_22 = arith.constant 0 : index
    %25 = vector.load %arg8[%c0_21, %c0_22] : memref<32x128xbf16, #tpu.memory_space<vmem>>, vector<1x128xbf16>
    tpu.vector_store %arg8[%c0_21, %c0_22], %24 {strides = array<i32>} : memref<32x128xbf16, #tpu.memory_space<vmem>>, vector<1x128xbf16>,
    %cst_23 = arith.constant 0.000000e+00 : bf16
    %26 = vector.broadcast %cst_23 : bf16 to vector<1x128xbf16>
    %c31 = arith.constant 31 : index
    %c0_24 = arith.constant 0 : index
    %27 = vector.load %arg8[%c31, %c0_24] : memref<32x128xbf16, #tpu.memory_space<vmem>>, vector<1x128xbf16>
    tpu.vector_store %arg8[%c31, %c0_24], %26 {strides = array<i32>} : memref<32x128xbf16, #tpu.memory_space<vmem>>, vector<1x128xbf16>,
    %28 = arith.truncf %23 : vector<30x128xf32> to vector<30x128xbf16>
    %c1_25 = arith.constant 1 : index
    %c0_26 = arith.constant 0 : index
    %29 = vector.load %arg8[%c1_25, %c0_26] : memref<32x128xbf16, #tpu.memory_space<vmem>>, vector<30x128xbf16>
    tpu.vector_store %arg8[%c1_25, %c0_26], %28 {strides = array<i32>} : memref<32x128xbf16, #tpu.memory_space<vmem>>, vector<30x128xbf16>,
    %cst_27 = arith.constant 0.000000e+00 : f32
    %30 = vector.broadcast %cst_27 : f32 to vector<30x128xf32>
    %c0_28 = arith.constant 0 : index
    %c0_29 = arith.constant 0 : index
    %31 = vector.load %arg8[%c0_28, %c0_29] : memref<32x128xbf16, #tpu.memory_space<vmem>>, vector<30x128xbf16>
    %c0_30 = arith.constant 0 : index
    %c0_31 = arith.constant 0 : index
    %c0_32 = arith.constant 0 : index
    %32 = vector.load %arg4[%c0_30, %c0_31, %c0_32] : memref<3x128x128xbf16, #tpu.memory_space<vmem>>, vector<1x128x128xbf16>
    %33 = vector.shape_cast %32 : vector<1x128x128xbf16> to vector<128x128xbf16>
    %cst_33 = arith.constant dense<0.000000e+00> : vector<30x128xf32>
    %34 = tpu.matmul %31, %33, %cst_33 {dimension_numbers = #tpu.dot_dimension_numbers<[1], [0], [0], [1], [0, 0, 1, 1], [], []>} : vector<30x128xbf16>, vector<128x128xbf16>, vector<30x128xf32> -> vector<30x128xf32>
    %35 = arith.addf %30, %34 : vector<30x128xf32>
    %c1_34 = arith.constant 1 : index
    %c0_35 = arith.constant 0 : index
    %36 = vector.load %arg8[%c1_34, %c0_35] : memref<32x128xbf16, #tpu.memory_space<vmem>>, vector<30x128xbf16>
    %c1_36 = arith.constant 1 : index
    %c0_37 = arith.constant 0 : index
    %c0_38 = arith.constant 0 : index
    %37 = vector.load %arg4[%c1_36, %c0_37, %c0_38] : memref<3x128x128xbf16, #tpu.memory_space<vmem>>, vector<1x128x128xbf16>
    %38 = vector.shape_cast %37 : vector<1x128x128xbf16> to vector<128x128xbf16>
    %cst_39 = arith.constant dense<0.000000e+00> : vector<30x128xf32>
    %39 = tpu.matmul %36, %38, %cst_39 {dimension_numbers = #tpu.dot_dimension_numbers<[1], [0], [0], [1], [0, 0, 1, 1], [], []>} : vector<30x128xbf16>, vector<128x128xbf16>, vector<30x128xf32> -> vector<30x128xf32>
    %40 = arith.addf %35, %39 : vector<30x128xf32>
    %c2_40 = arith.constant 2 : index
    %c0_41 = arith.constant 0 : index
    %41 = vector.load %arg8[%c2_40, %c0_41] : memref<32x128xbf16, #tpu.memory_space<vmem>>, vector<30x128xbf16>
    %c2_42 = arith.constant 2 : index
    %c0_43 = arith.constant 0 : index
    %c0_44 = arith.constant 0 : index
    %42 = vector.load %arg4[%c2_42, %c0_43, %c0_44] : memref<3x128x128xbf16, #tpu.memory_space<vmem>>, vector<1x128x128xbf16>
    %43 = vector.shape_cast %42 : vector<1x128x128xbf16> to vector<128x128xbf16>
    %cst_45 = arith.constant dense<0.000000e+00> : vector<30x128xf32>
    %44 = tpu.matmul %41, %43, %cst_45 {dimension_numbers = #tpu.dot_dimension_numbers<[1], [0], [0], [1], [0, 0, 1, 1], [], []>} : vector<30x128xbf16>, vector<128x128xbf16>, vector<30x128xf32> -> vector<30x128xf32>
    %45 = arith.addf %40, %44 : vector<30x128xf32>
    %c0_46 = arith.constant 0 : index
    %c0_47 = arith.constant 0 : index
    %46 = vector.load %arg5[%c0_46, %c0_47] : memref<1x128xf32, #tpu.memory_space<vmem>>, vector<1x128xf32>
    %47 = vector.broadcast %46 : vector<1x128xf32> to vector<30x128xf32>
    %48 = arith.addf %45, %47 : vector<30x128xf32>
    %cst_48 = arith.constant 0.000000e+00 : f32
    %49 = vector.broadcast %cst_48 : f32 to vector<30x128xf32>
    %50 = arith.maximumf %48, %49 : vector<30x128xf32>
    %c0_49 = arith.constant 0 : index
    %c0_50 = arith.constant 0 : index
    %51 = vector.load %arg7[%c0_49, %c0_50] : memref<32x128xf32, #tpu.memory_space<vmem>>, vector<30x128xf32>
    tpu.vector_store %arg7[%c0_49, %c0_50], %50 {strides = array<i32>} : memref<32x128xf32, #tpu.memory_space<vmem>>, vector<30x128xf32>,
    %cst_51 = arith.constant 0.000000e+00 : f32
    %52 = vector.broadcast %cst_51 : f32 to vector<2x128xf32>
    %c30 = arith.constant 30 : index
    %c0_52 = arith.constant 0 : index
    %53 = vector.load %arg7[%c30, %c0_52] : memref<32x128xf32, #tpu.memory_space<vmem>>, vector<2x128xf32>
    tpu.vector_store %arg7[%c30, %c0_52], %52 {strides = array<i32>} : memref<32x128xf32, #tpu.memory_space<vmem>>, vector<2x128xf32>,
    return
  }
  func.func @transform_0(%arg0: i32) -> (i32, i32) {
    %c0_i32 = arith.constant 0 : i32
    %c0_i32_0 = arith.constant 0 : i32
    return %arg0, %c0_i32 : i32, i32
  }
  func.func @transform_1(%arg0: i32) -> (i32, i32, i32) {
    %c0_i32 = arith.constant 0 : i32
    %c0_i32_0 = arith.constant 0 : i32
    %c0_i32_1 = arith.constant 0 : i32
    %c0_i32_2 = arith.constant 0 : i32
    return %c0_i32, %c0_i32_0, %c0_i32_1 : i32, i32, i32
  }
  func.func @transform_2(%arg0: i32) -> (i32, i32) {
    %c0_i32 = arith.constant 0 : i32
    %c0_i32_0 = arith.constant 0 : i32
    %c0_i32_1 = arith.constant 0 : i32
    return %c0_i32, %c0_i32_0 : i32, i32
  }
  func.func @transform_3(%arg0: i32) -> (i32, i32, i32) {
    %c0_i32 = arith.constant 0 : i32
    %c0_i32_0 = arith.constant 0 : i32
    %c0_i32_1 = arith.constant 0 : i32
    %c0_i32_2 = arith.constant 0 : i32
    return %c0_i32, %c0_i32_0, %c0_i32_1 : i32, i32, i32
  }
  func.func @transform_4(%arg0: i32) -> (i32, i32) {
    %c0_i32 = arith.constant 0 : i32
    %c0_i32_0 = arith.constant 0 : i32
    %c0_i32_1 = arith.constant 0 : i32
    return %c0_i32, %c0_i32_0 : i32, i32
  }
  func.func @transform_5(%arg0: i32) -> (i32, i32) {
    %c0_i32 = arith.constant 0 : i32
    %c0_i32_0 = arith.constant 0 : i32
    %c0_i32_1 = arith.constant 0 : i32
    return %c0_i32, %c0_i32_0 : i32, i32
  }
  func.func @transform_6(%arg0: i32) -> (i32, i32) {
    %c0_i32 = arith.constant 0 : i32
    %c0_i32_0 = arith.constant 0 : i32
    return %arg0, %c0_i32 : i32, i32
  }
}

</mosaic_0001>

<llo_original>
// kernel: tpu_custom_call.1
$region0: #{tpu_custom_call.1}
  #allocation0 [shape = 'u32[]', space=smem, size = 0x4, offset = 0x4, fixed_abs, tag = 'smem constant byte address 0x4 - core index']
  #allocation1 [shape = 'u32[144,128]{1,0:T(1,128)}', space=vmem, size = 0x12000, scoped, tag = 'internal scratch']
  #allocation2 [shape = 'bf16[32,128]{1,0:T(8,128)(2,1)}', space=vmem, size = 0x2000, scoped, tag = 'scratch operand']
  %s0 = inlined_call_operand.vmem [shape: bf16[64,64], index: 0, kind: input, shape index: {}]
  %s1 = inlined_call_operand.hbm [shape: bf16[3,64,128], index: 1, kind: input, shape index: {}]
  %s2 = inlined_call_operand.vmem [shape: f32[1,128], index: 2, kind: input, shape index: {}]
  %s3 = inlined_call_operand.hbm [shape: bf16[3,128,128], index: 3, kind: input, shape index: {}]
  %s4 = inlined_call_operand.vmem [shape: f32[1,128], index: 4, kind: input, shape index: {}]
  %s5 = inlined_call_operand.vmem [shape: f32[30,1], index: 5, kind: input, shape index: {}]
  %s6 = inlined_call_operand.hbm [shape: f32[64,128], index: 6, kind: output, shape index: {}]
  %s7 = sld [smem:[#allocation0]]
  $region65: #{tpu_custom_call.1} parent=0
    _
  %s9 = ssub.s32 1, %s7
  %s10 = scalar_select 0, %s9, %s7
  $region1: #{tpu_custom_call.1} parent=0
    #allocation3 [shape = 'u8[49152]{0}', space=vmem, size = 0xc000, scoped, tag = 'input window, operand 1, single buffered']
    #allocation4 [shape = 's32[2]{0}', space=sflag, size = 0x8, scoped, tag = 'scoped memory for tpu_custom_call.1']
    #allocation5 [shape = 's32[2]{0}', space=sflag, size = 0x8, scoped, tag = 'scoped memory for tpu_custom_call.1']
    #allocation6 [shape = 'u8[98304]{0}', space=vmem, size = 0x18000, scoped, tag = 'input window, operand 3, single buffered']
    #allocation7 [shape = 's32[1]{0}', space=sflag, size = 0x4, scoped, tag = 'scoped memory for tpu_custom_call.1']
    #allocation8 [shape = 'u8[32768]{0}', space=vmem, size = 0x8000, scoped, tag = 'output window, operand 0']
    %11 = vsyncpa [#allocation4], 0
    %12 = vsyncpa [#allocation7], 0
    %13 = vsyncpa [#allocation5], 0
    %s14 = scalar_lea.sflag [#allocation5], 1
    %15 = vsyncpa %s14, 0
    loop: start=0, step=1, limit=4
    $region2: #{tpu_custom_call.1} parent=1 // loop_pre_header
      _
    $region3: #{tpu_custom_call.1} parent=1 // loop_header
      %s17 = sphi 0, %s21
      %p18 = scmp.ge.s32.totalorder %s17, 4
      %s27 = sphi 0, %s29
      %s30 = sphi 0, %s27
      %s31 = sphi 0, %s30
      %s47 = sphi 0, %s31
      %s51 = sphi 0, %s51
      %s53 = sphi 0, %s51
      %s54 = sphi 0, %s53
      %s68 = sphi 0, %s54
      %s72 = sphi 0, %s72
      %s74 = sphi 0, %s72
      %s75 = sphi 0, %s74
      %s89 = sphi 0, %s75
      %s93 = sphi 0, %s93
      %s95 = sphi 0, %s93
      %s96 = sphi 0, %s95
      %s110 = sphi 0, %s96
      %s114 = sphi 0, %s114
      %s116 = sphi 0, %s114
      %s117 = sphi 0, %s116
      %s131 = sphi 0, %s117
      %s135 = sphi 0, %s135
      %s137 = sphi 0, %s135
      %s138 = sphi 0, %s137
      %s152 = sphi 0, %s138
      %s158 = sphi 0, %s160
      %s161 = sphi 0, %s158
      %s162 = sphi 0, %s161
      %s178 = sphi 0, %s162
    $region4: #{tpu_custom_call.1} parent=1 // loop_header_branch
      %20 = sbr.rel (%p18) target = $region8
    $region5: #{tpu_custom_call.1} parent=1 // loop_body
      %s22 = ssub.s32 %s17, 1
      %s23 = ssub.s32 %s17, 2
      %s24 = sadd.s32 %s17, 1
      %s25 = ssub.s32 %s17, %s24
      %p26 = scmp.eq.s32.totalorder %s25, 0
      %s28 = sadd.s32 %s27, 1
      %s29 = scalar_select %p26, %s27, %s28
      %p32 = pneg %p26
      %p33 = scmp.eq.s32.totalorder %s17, 1
      %p34 = por %p32, %p33
      %p35 = scmp.ne.s32.totalorder %s27, %s30
      %p36 = scmp.eq.s32.totalorder %s17, 0
      %p37 = por %p35, %p36
      %p38 = scmp.ne.s32.totalorder %s27, %s30
      %p39 = scmp.eq.s32.totalorder %s22, 1
      %p40 = por %p38, %p39
      %p41 = scmp.ne.s32.totalorder %s30, %s31
      %p42 = scmp.eq.s32.totalorder %s22, 0
      %p43 = por %p41, %p42
      %p44 = scmp.ne.s32.totalorder %s30, %s31
      %p45 = scmp.eq.s32.totalorder %s23, 1
      %p46 = por %p44, %p45
      %p48 = scmp.ne.s32.totalorder %s31, %s47
      %p49 = scmp.eq.s32.totalorder %s23, 0
      %p50 = por %p48, %p49
      %s52 = sadd.s32 %s51, 1
      %p55 = scmp.eq.s32.totalorder %s17, 1
      %p56 = scmp.ne.s32.totalorder %s51, %s53
      %p57 = scmp.eq.s32.totalorder %s17, 0
      %p58 = por %p56, %p57
      %p59 = scmp.ne.s32.totalorder %s51, %s53
      %p60 = scmp.eq.s32.totalorder %s22, 1
      %p61 = por %p59, %p60
      %p62 = scmp.ne.s32.totalorder %s53, %s54
      %p63 = scmp.eq.s32.totalorder %s22, 0
      %p64 = por %p62, %p63
      %p65 = scmp.ne.s32.totalorder %s53, %s54
      %p66 = scmp.eq.s32.totalorder %s23, 1
      %p67 = por %p65, %p66
      %p69 = scmp.ne.s32.totalorder %s54, %s68
      %p70 = scmp.eq.s32.totalorder %s23, 0
      %p71 = por %p69, %p70
      %s73 = sadd.s32 %s72, 1
      %p76 = scmp.eq.s32.totalorder %s17, 1
      %p77 = scmp.ne.s32.totalorder %s72, %s74
      %p78 = scmp.eq.s32.totalorder %s17, 0
      %p79 = por %p77, %p78
      %p80 = scmp.ne.s32.totalorder %s72, %s74
      %p81 = scmp.eq.s32.totalorder %s22, 1
      %p82 = por %p80, %p81
      %p83 = scmp.ne.s32.totalorder %s74, %s75
      %p84 = scmp.eq.s32.totalorder %s22, 0
      %p85 = por %p83, %p84
      %p86 = scmp.ne.s32.totalorder %s74, %s75
      %p87 = scmp.eq.s32.totalorder %s23, 1
      %p88 = por %p86, %p87
      %p90 = scmp.ne.s32.totalorder %s75, %s89
      %p91 = scmp.eq.s32.totalorder %s23, 0
      %p92 = por %p90, %p91
      %s94 = sadd.s32 %s93, 1
      %p97 = scmp.eq.s32.totalorder %s17, 1
      %p98 = scmp.ne.s32.totalorder %s93, %s95
      %p99 = scmp.eq.s32.totalorder %s17, 0
      %p100 = por %p98, %p99
      %p101 = scmp.ne.s32.totalorder %s93, %s95
      %p102 = scmp.eq.s32.totalorder %s22, 1
      %p103 = por %p101, %p102
      %p104 = scmp.ne.s32.totalorder %s95, %s96
      %p105 = scmp.eq.s32.totalorder %s22, 0
      %p106 = por %p104, %p105
      %p107 = scmp.ne.s32.totalorder %s95, %s96
      %p108 = scmp.eq.s32.totalorder %s23, 1
      %p109 = por %p107, %p108
      %p111 = scmp.ne.s32.totalorder %s96, %s110
      %p112 = scmp.eq.s32.totalorder %s23, 0
      %p113 = por %p111, %p112
      %s115 = sadd.s32 %s114, 1
      %p118 = scmp.eq.s32.totalorder %s17, 1
      %p119 = scmp.ne.s32.totalorder %s114, %s116
      %p120 = scmp.eq.s32.totalorder %s17, 0
      %p121 = por %p119, %p120
      %p122 = scmp.ne.s32.totalorder %s114, %s116
      %p123 = scmp.eq.s32.totalorder %s22, 1
      %p124 = por %p122, %p123
      %p125 = scmp.ne.s32.totalorder %s116, %s117
      %p126 = scmp.eq.s32.totalorder %s22, 0
      %p127 = por %p125, %p126
      %p128 = scmp.ne.s32.totalorder %s116, %s117
      %p129 = scmp.eq.s32.totalorder %s23, 1
      %p130 = por %p128, %p129
      %p132 = scmp.ne.s32.totalorder %s117, %s131
      %p133 = scmp.eq.s32.totalorder %s23, 0
      %p134 = por %p132, %p133
      %s136 = sadd.s32 %s135, 1
      %p139 = scmp.eq.s32.totalorder %s17, 1
      %p140 = scmp.ne.s32.totalorder %s135, %s137
      %p141 = scmp.eq.s32.totalorder %s17, 0
      %p142 = por %p140, %p141
      %p143 = scmp.ne.s32.totalorder %s135, %s137
      %p144 = scmp.eq.s32.totalorder %s22, 1
      %p145 = por %p143, %p144
      %p146 = scmp.ne.s32.totalorder %s137, %s138
      %p147 = scmp.eq.s32.totalorder %s22, 0
      %p148 = por %p146, %p147
      %p149 = scmp.ne.s32.totalorder %s137, %s138
      %p150 = scmp.eq.s32.totalorder %s23, 1
      %p151 = por %p149, %p150
      %p153 = scmp.ne.s32.totalorder %s138, %s152
      %p154 = scmp.eq.s32.totalorder %s23, 0
      %p155 = por %p153, %p154
      %s156 = ssub.s32 %s17, %s24
      %p157 = scmp.eq.s32.totalorder %s156, 0
      %s159 = sadd.s32 %s158, 1
      %s160 = scalar_select %p157, %s158, %s159
      %p163 = pneg %p157
      %p164 = scmp.eq.s32.totalorder %s17, 1
      %p165 = por %p163, %p164
      %p166 = scmp.ne.s32.totalorder %s158, %s161
      %p167 = scmp.eq.s32.totalorder %s17, 0
      %p168 = por %p166, %p167
      %p169 = scmp.ne.s32.totalorder %s158, %s161
      %p170 = scmp.eq.s32.totalorder %s22, 1
      %p171 = por %p169, %p170
      %p172 = scmp.ne.s32.totalorder %s161, %s162
      %p173 = scmp.eq.s32.totalorder %s22, 0
      %p174 = por %p172, %p173
      %p175 = scmp.ne.s32.totalorder %s161, %s162
      %p176 = scmp.eq.s32.totalorder %s23, 1
      %p177 = por %p175, %p176
      %p179 = scmp.ne.s32.totalorder %s162, %s178
      %p180 = scmp.eq.s32.totalorder %s23, 0
      %p181 = por %p179, %p180
      %p182 = scmp.le.s32.totalorder 1, %s17
      %p183 = scmp.lt.s32.totalorder %s17, 3
      %p184 = pnand %p182, %p183
      %p185 = pneg %p184
      // Predicated region
      $region9: #{tpu_custom_call.1} parent=5 // pred_check
        _
      $region10: #{tpu_custom_call.1} parent=5 // pred_check_branch
        %187 = sbr.rel (%p184) target = $region12
      $region11: #{tpu_custom_call.1} parent=5 // pred_region
        %s188 = ssub.s32 %s17, 1
        // Predicated region
        $region13: #{tpu_custom_call.1} parent=11 // pred_check
          %p189 = pneg %p64
        $region14: #{tpu_custom_call.1} parent=11 // pred_check_branch
          %191 = sbr.rel (%p189) target = $region16
        $region15: #{tpu_custom_call.1} parent=11 // pred_region
          %s193 = ssub.s32 1536, 1536
          %194 = vsyncadd [#allocation4], %s193
          %s195 = sshll.u32 [#allocation3], 4
          %s196 = int_to_ptr.vmem [resolvable:$true] %s195
          %201 = dma.hbm_to_vmem [thread:$0]  %s1, 1536, %s196, [#allocation4], 64, 64, 4
        $region16: #{tpu_custom_call.1} parent=11 // pred_fallthru
          _
        // Predicated region
        $region17: #{tpu_custom_call.1} parent=11 // pred_check
          %p202 = pneg %p85
        $region18: #{tpu_custom_call.1} parent=11 // pred_check_branch
          %204 = sbr.rel (%p202) target = $region20
        $region19: #{tpu_custom_call.1} parent=11 // pred_region
          _
        $region20: #{tpu_custom_call.1} parent=11 // pred_fallthru
          _
        // Predicated region
        $region21: #{tpu_custom_call.1} parent=11 // pred_check
          %p205 = pneg %p106
        $region22: #{tpu_custom_call.1} parent=11 // pred_check_branch
          %207 = sbr.rel (%p205) target = $region24
        $region23: #{tpu_custom_call.1} parent=11 // pred_region
          %s209 = ssub.s32 3072, 3072
          %210 = vsyncadd [#allocation7], %s209
          %s211 = sshll.u32 [#allocation6], 4
          %s212 = int_to_ptr.vmem [resolvable:$true] %s211
          %217 = dma.hbm_to_vmem [thread:$0]  %s3, 3072, %s212, [#allocation7], 64, 64, 4
        $region24: #{tpu_custom_call.1} parent=11 // pred_fallthru
          _
        // Predicated region
        $region25: #{tpu_custom_call.1} parent=11 // pred_check
          %p218 = pneg %p127
        $region26: #{tpu_custom_call.1} parent=11 // pred_check_branch
          %220 = sbr.rel (%p218) target = $region28
        $region27: #{tpu_custom_call.1} parent=11 // pred_region
          _
        $region28: #{tpu_custom_call.1} parent=11 // pred_fallthru
          _
        // Predicated region
        $region29: #{tpu_custom_call.1} parent=11 // pred_check
          %p221 = pneg %p148
        $region30: #{tpu_custom_call.1} parent=11 // pred_check_branch
          %223 = sbr.rel (%p221) target = $region32
        $region31: #{tpu_custom_call.1} parent=11 // pred_region
          _
        $region32: #{tpu_custom_call.1} parent=11 // pred_fallthru
          _
      $region12: #{tpu_custom_call.1} parent=5 // pred_fallthru
        _
      %p224 = scmp.lt.s32.totalorder %s17, 2
      // Predicated region
      $region33: #{tpu_custom_call.1} parent=5 // pred_check
        %p225 = pneg %p224
      $region34: #{tpu_custom_call.1} parent=5 // pred_check_branch
        %227 = sbr.rel (%p225) target = $region36
      $region35: #{tpu_custom_call.1} parent=5 // pred_region
        // Predicated region
        $region37: #{tpu_custom_call.1} parent=35 // pred_check
          %p228 = pneg %p37
        $region38: #{tpu_custom_call.1} parent=35 // pred_check_branch
          %230 = sbr.rel (%p228) target = $region40
        $region39: #{tpu_custom_call.1} parent=35 // pred_region
          %s231 = smul.u32 4, %s17
          %p232 = scmp.lt.s32.totalorder %s231, 7
          %s233 = scalar_select %p232, %s231, 7
          %s234 = smul.addr %s233, 4
          %s235 = scalar_lea.vmem %s0, %s234
          %s236 = smul.u32 4, %s17
        $region40: #{tpu_custom_call.1} parent=35 // pred_fallthru
          _
      $region36: #{tpu_custom_call.1} parent=5 // pred_fallthru
        _
      %p237 = scmp.le.s32.totalorder 1, %s17
      %p238 = scmp.lt.s32.totalorder %s17, 3
      %p239 = pnand %p237, %p238
      %p240 = pneg %p239
      // Predicated region
      $region41: #{tpu_custom_call.1} parent=5 // pred_check
        _
      $region42: #{tpu_custom_call.1} parent=5 // pred_check_branch
        %242 = sbr.rel (%p239) target = $region44
      $region43: #{tpu_custom_call.1} parent=5 // pred_region
        %s243 = ssub.s32 %s17, 1
        // Predicated region
        $region45: #{tpu_custom_call.1} parent=43 // pred_check
          %p244 = pneg %p64
        $region46: #{tpu_custom_call.1} parent=43 // pred_check_branch
          %246 = sbr.rel (%p244) target = $region48
        $region47: #{tpu_custom_call.1} parent=43 // pred_region
          %247 = dma.done [#allocation4], 1536
        $region48: #{tpu_custom_call.1} parent=43 // pred_fallthru
          _
        // Predicated region
        $region49: #{tpu_custom_call.1} parent=43 // pred_check
          %p248 = pneg %p106
        $region50: #{tpu_custom_call.1} parent=43 // pred_check_branch
          %250 = sbr.rel (%p248) target = $region52
        $region51: #{tpu_custom_call.1} parent=43 // pred_region
          %251 = dma.done [#allocation7], 3072
        $region52: #{tpu_custom_call.1} parent=43 // pred_fallthru
          _
        %s252 = smul.u32 4, %s22
        %p253 = scmp.lt.s32.totalorder %s252, 7
        %s254 = scalar_select %p253, %s252, 7
        %s255 = smul.addr %s254, 4
        %s256 = scalar_lea.vmem %s0, %s255
        %p257 = pneg %p43
        %p258 = pneg %p40
        %p259 = pneg %p64
        %p260 = pneg %p61
        %p261 = pneg %p85
        %p262 = pneg %p82
        %p263 = pneg %p106
        %p264 = pneg %p103
        %p265 = pneg %p127
        %p266 = pneg %p124
        %p267 = pneg %p148
        %p268 = pneg %p145
        %p269 = pneg %p174
        %p270 = pneg %p171
        %s271 = sand.u32 %s161, 1
        %s272 = scalar_lea.sflag [#allocation5], %s271
        %s273 = sand.u32 %s161, 1
        %s274 = smul.addr %s273, 32
        %s275 = scalar_lea.vmem [#allocation8], %s274
        %s276 = smul.u32 4, %s22
        %p277 = scmp.lt.s32.totalorder %s276, 7
        %s278 = scalar_select %p277, %s276, 7
        %s279 = smul.addr %s278, 4
        %s280 = scalar_lea.vmem %s0, %s279
        %s281 = smul.u32 4, %s22
        %s282 = smul.u32 4, %s22
        %v284 = vld [vmem:[%s280] sm:$0xf]
        %v285 = vld [vmem:[%s280 + $0x4] sm:$0xf]
        %v286 = vld [vmem:[%s280 + $0x8] sm:$0xf]
        %v287 = vld [vmem:[%s280 + $0xc] sm:$0x7]
        %v288 = vld [vmem:[#allocation3] sm:$0xf]
        %v289 = vld [vmem:[#allocation3 + $0x4] sm:$0xf]
        %v290 = vld [vmem:[#allocation3 + $0x8] sm:$0xf]
        %v291 = vld [vmem:[#allocation3 + $0xc] sm:$0xf]
        %v292 = vld [vmem:[#allocation3 + $0x10] sm:$0xf]
        %v293 = vld [vmem:[#allocation3 + $0x14] sm:$0xf]
        %v294 = vld [vmem:[#allocation3 + $0x18] sm:$0xf]
        %v295 = vld [vmem:[#allocation3 + $0x1c] sm:$0xf]
        %v296 = vld [vmem:[%s280 + $0xc] sm:$0xf]
        %s297 = scalar_lea.vmem [#allocation3], 32
        %v298 = vld [vmem:[%s297] sm:$0xf]
        %v299 = vld [vmem:[%s297 + $0x4] sm:$0xf]
        %v300 = vld [vmem:[%s297 + $0x8] sm:$0xf]
        %v301 = vld [vmem:[%s297 + $0xc] sm:$0xf]
        %v302 = vld [vmem:[%s297 + $0x10] sm:$0xf]
        %v303 = vld [vmem:[%s297 + $0x14] sm:$0xf]
        %v304 = vld [vmem:[%s297 + $0x18] sm:$0xf]
        %v305 = vld [vmem:[%s297 + $0x1c] sm:$0xf]
        %v310 = vunpack.c.l.b16 %v284
        %v311 = vunpack.c.l.b16 %v285
        %v312 = vunpack.c.l.b16 %v286
        %v313 = vunpack.c.l.b16 %v296
        %v314 = vpack.c.b16 %v311, %v310
        %v315 = vpack.c.b16 %v313, %v312
        %vm316 = vsmask.f32 7424
        %v318 = vshrl.u32 %v314, 16
        %v320 = vshll.u32 %v314, 16
        %v322 = vrot.slane %v320, 1
        %v323 = vor.u32 %v318, %v322
        %v325 = vshll.u32 %v315, 16
        %v327 = vrot.slane %v325, 1
        %v328 = vsel %vm316, %v323, %v327
        %v329 = vshrl.u32 %v315, 16
        %v331 = vor.u32 %v329, %v327
        %v340 = vunpack.c.l.b16 %v298
        %v341 = vunpack.c.l.b16 %v299
        %v342 = vunpack.c.l.b16 %v300
        %v343 = vunpack.c.l.b16 %v301
        %v344 = vunpack.c.l.b16 %v302
        %v345 = vunpack.c.l.b16 %v303
        %v346 = vunpack.c.l.b16 %v304
        %v347 = vunpack.c.l.b16 %v305
        %v348 = vpack.c.b16 %v341, %v340
        %v349 = vpack.c.b16 %v343, %v342
        %v350 = vpack.c.b16 %v345, %v344
        %v351 = vpack.c.b16 %v347, %v346
        %vm356 = vcmask 523264
        %v358 = vsel %vm356, %v328, 0
        %v361 = vsel %vm356, %v331, 0
        %363 = vmatprep.subr.bf16.mxu0 0
        %364 = vmatpush1.bf16.msra.mxu0 0
        %365 = vmatprep.subr.bf16.mxu0 0
        %366 = vmatpush1.bf16.msra.mxu0 0
        %367 = vmatprep.subr.bf16.mxu0 0
        %368 = vmatpush1.bf16.msra.mxu0 0
        %369 = vmatprep.subr.bf16.mxu0 0
        %370 = vmatpush1.bf16.msra.mxu0 0
        %371 = vmatprep.subr.bf16.mxu0 0
        %372 = vmatpush1.bf16.msra.mxu0 %v351
        %373 = vmatprep.subr.bf16.mxu0 0
        %374 = vmatpush1.bf16.msra.mxu0 %v350
        %375 = vmatprep.subr.bf16.mxu0 0
        %376 = vmatpush1.bf16.msra.mxu0 %v349
        %377 = vmatprep.subr.bf16.mxu0 0
        %378 = vmatpush1.bf16.msra.mxu0 %v348
        %379 = vmatprep.subr.bf16.mxu0 0
        %380 = vmatpush2.bf16.msra.mxu0 0
        %381 = vmatprep.subr.bf16.mxu0 0
        %382 = vmatpush2.bf16.msra.mxu0 0
        %383 = vmatprep.subr.bf16.mxu0 0
        %384 = vmatpush2.bf16.msra.mxu0 0
        %385 = vmatprep.subr.bf16.mxu0 0
        %386 = vmatpush2.bf16.msra.mxu0 0
        %387 = vmatprep.subr.bf16.mxu0 0
        %388 = vmatpush2.bf16.msra.mxu0 0
        %389 = vmatprep.subr.bf16.mxu0 0
        %390 = vmatpush2.bf16.msra.mxu0 0
        %391 = vmatprep.subr.bf16.mxu0 0
        %392 = vmatpush2.bf16.msra.mxu0 0
        %393 = vmatprep.subr.bf16.mxu0 0
        %394 = vmatpush2.bf16.msra.mxu0 0
        %395 = vmatprep.mubr.bf16.mxu0 0
        %396 = vmatmul.mubr.bf16.gmra.mxu0 %v358
        %v397 = vpop.f32.mrf.mxu0
        %v398 = vadd.f32 0.0, %v397
        %v399 = vpop.f32.mrf.mxu0
        %v400 = vpop.f32.mrf.mxu0
        %v401 = vadd.f32 0.0, %v400
        %v402 = vpop.f32.mrf.mxu0
        %403 = vmatprep.mubr.bf16.mxu0 0
        %404 = vmatmul.mubr.bf16.gmra.mxu0 %v361
        %v405 = vpop.f32.mrf.mxu0
        %v406 = vadd.f32 0.0, %v405
        %v407 = vpop.f32.mrf.mxu0
        %v408 = vpop.f32.mrf.mxu0
        %v409 = vadd.f32 0.0, %v408
        %v410 = vpop.f32.mrf.mxu0
        %411 = vdwg.mxu0
        %v413 = vunpack.c.l.b16 %v287
        %v414 = vpack.c.b16 %v413, %v312
        %v423 = vunpack.c.l.b16 %v288
        %v424 = vunpack.c.l.b16 %v289
        %v425 = vunpack.c.l.b16 %v290
        %v426 = vunpack.c.l.b16 %v291
        %v427 = vunpack.c.l.b16 %v292
        %v428 = vunpack.c.l.b16 %v293
        %v429 = vunpack.c.l.b16 %v294
        %v430 = vunpack.c.l.b16 %v295
        %v431 = vpack.c.b16 %v424, %v423
        %v432 = vpack.c.b16 %v426, %v425
        %v433 = vpack.c.b16 %v428, %v427
        %v434 = vpack.c.b16 %v430, %v429
        %v439 = vsel %vm356, %v314, 0
        %v442 = vsel %vm356, %v414, 0
        %444 = vmatprep.subr.bf16.mxu0 0
        %445 = vmatpush1.bf16.msra.mxu0 0
        %446 = vmatprep.subr.bf16.mxu0 0
        %447 = vmatpush1.bf16.msra.mxu0 0
        %448 = vmatprep.subr.bf16.mxu0 0
        %449 = vmatpush1.bf16.msra.mxu0 0
        %450 = vmatprep.subr.bf16.mxu0 0
        %451 = vmatpush1.bf16.msra.mxu0 0
        %452 = vmatprep.subr.bf16.mxu0 0
        %453 = vmatpush1.bf16.msra.mxu0 %v434
        %454 = vmatprep.subr.bf16.mxu0 0
        %455 = vmatpush1.bf16.msra.mxu0 %v433
        %456 = vmatprep.subr.bf16.mxu0 0
        %457 = vmatpush1.bf16.msra.mxu0 %v432
        %458 = vmatprep.subr.bf16.mxu0 0
        %459 = vmatpush1.bf16.msra.mxu0 %v431
        %460 = vmatprep.subr.bf16.mxu0 0
        %461 = vmatpush2.bf16.msra.mxu0 0
        %462 = vmatprep.subr.bf16.mxu0 0
        %463 = vmatpush2.bf16.msra.mxu0 0
        %464 = vmatprep.subr.bf16.mxu0 0
        %465 = vmatpush2.bf16.msra.mxu0 0
        %466 = vmatprep.subr.bf16.mxu0 0
        %467 = vmatpush2.bf16.msra.mxu0 0
        %468 = vmatprep.subr.bf16.mxu0 0
        %469 = vmatpush2.bf16.msra.mxu0 0
        %470 = vmatprep.subr.bf16.mxu0 0
        %471 = vmatpush2.bf16.msra.mxu0 0
        %472 = vmatprep.subr.bf16.mxu0 0
        %473 = vmatpush2.bf16.msra.mxu0 0
        %474 = vmatprep.subr.bf16.mxu0 0
        %475 = vmatpush2.bf16.msra.mxu0 0
        %476 = vmatprep.mubr.bf16.mxu0 0
        %477 = vmatmul.mubr.bf16.gmra.mxu0 %v439
        %v478 = vpop.f32.mrf.mxu0
        %v479 = vadd.f32 %v398, %v478
        %v480 = vpop.f32.mrf.mxu0
        %v481 = vpop.f32.mrf.mxu0
        %v482 = vadd.f32 %v401, %v481
        %v483 = vpop.f32.mrf.mxu0
        %484 = vmatprep.mubr.bf16.mxu0 0
        %485 = vmatmul.mubr.bf16.gmra.mxu0 %v442
        %v486 = vpop.f32.mrf.mxu0
        %v487 = vadd.f32 %v406, %v486
        %v488 = vpop.f32.mrf.mxu0
        %v489 = vpop.f32.mrf.mxu0
        %v490 = vadd.f32 %v409, %v489
        %v491 = vpop.f32.mrf.mxu0
        %492 = vdwg.mxu0
        %v493 = vld [vmem:[%s280] sm:$0xe]
        %s494 = scalar_lea.vmem [#allocation3], 64
        %v495 = vld [vmem:[%s494] sm:$0xf]
        %v496 = vld [vmem:[%s494 + $0x4] sm:$0xf]
        %v497 = vld [vmem:[%s494 + $0x8] sm:$0xf]
        %v498 = vld [vmem:[%s494 + $0xc] sm:$0xf]
        %v499 = vld [vmem:[%s494 + $0x10] sm:$0xf]
        %v500 = vld [vmem:[%s494 + $0x14] sm:$0xf]
        %v501 = vld [vmem:[%s494 + $0x18] sm:$0xf]
        %v502 = vld [vmem:[%s494 + $0x1c] sm:$0xf]
        %v504 = vunpack.c.l.b16 %v493
        %v505 = vpack.c.b16 %v311, %v504
        %vm506 = vcmask 1046528
        %v507 = vrot.slane %v505, 1
        %v508 = vrot.slane %v315, 1
        %v509 = vsel %vm506, %v507, %v508
        %v518 = vunpack.c.l.b16 %v495
        %v519 = vunpack.c.l.b16 %v496
        %v520 = vunpack.c.l.b16 %v497
        %v521 = vunpack.c.l.b16 %v498
        %v522 = vunpack.c.l.b16 %v499
        %v523 = vunpack.c.l.b16 %v500
        %v524 = vunpack.c.l.b16 %v501
        %v525 = vunpack.c.l.b16 %v502
        %v526 = vpack.c.b16 %v519, %v518
        %v527 = vpack.c.b16 %v521, %v520
        %v528 = vpack.c.b16 %v523, %v522
        %v529 = vpack.c.b16 %v525, %v524
        %v535 = vsel %vm356, %v509, 0
        %v538 = vsel %vm356, %v508, 0
        %540 = vmatprep.subr.bf16.mxu0 0
        %541 = vmatpush1.bf16.msra.mxu0 0
        %542 = vmatprep.subr.bf16.mxu0 0
        %543 = vmatpush1.bf16.msra.mxu0 0
        %544 = vmatprep.subr.bf16.mxu0 0
        %545 = vmatpush1.bf16.msra.mxu0 0
        %546 = vmatprep.subr.bf16.mxu0 0
        %547 = vmatpush1.bf16.msra.mxu0 0
        %548 = vmatprep.subr.bf16.mxu0 0
        %549 = vmatpush1.bf16.msra.mxu0 %v529
        %550 = vmatprep.subr.bf16.mxu0 0
        %551 = vmatpush1.bf16.msra.mxu0 %v528
        %552 = vmatprep.subr.bf16.mxu0 0
        %553 = vmatpush1.bf16.msra.mxu0 %v527
        %554 = vmatprep.subr.bf16.mxu0 0
        %555 = vmatpush1.bf16.msra.mxu0 %v526
        %556 = vmatprep.subr.bf16.mxu0 0
        %557 = vmatpush2.bf16.msra.mxu0 0
        %558 = vmatprep.subr.bf16.mxu0 0
        %559 = vmatpush2.bf16.msra.mxu0 0
        %560 = vmatprep.subr.bf16.mxu0 0
        %561 = vmatpush2.bf16.msra.mxu0 0
        %562 = vmatprep.subr.bf16.mxu0 0
        %563 = vmatpush2.bf16.msra.mxu0 0
        %564 = vmatprep.subr.bf16.mxu0 0
        %565 = vmatpush2.bf16.msra.mxu0 0
        %566 = vmatprep.subr.bf16.mxu0 0
        %567 = vmatpush2.bf16.msra.mxu0 0
        %568 = vmatprep.subr.bf16.mxu0 0
        %569 = vmatpush2.bf16.msra.mxu0 0
        %570 = vmatprep.subr.bf16.mxu0 0
        %571 = vmatpush2.bf16.msra.mxu0 0
        %572 = vmatprep.mubr.bf16.mxu0 0
        %573 = vmatmul.mubr.bf16.gmra.mxu0 %v535
        %v574 = vpop.f32.mrf.mxu0
        %v575 = vadd.f32 0.0, %v574
        %v576 = vpop.f32.mrf.mxu0
        %v577 = vpop.f32.mrf.mxu0
        %v578 = vadd.f32 0.0, %v577
        %v579 = vpop.f32.mrf.mxu0
        %580 = vmatprep.mubr.bf16.mxu0 0
        %581 = vmatmul.mubr.bf16.gmra.mxu0 %v538
        %v582 = vpop.f32.mrf.mxu0
        %v583 = vadd.f32 0.0, %v582
        %v584 = vpop.f32.mrf.mxu0
        %v585 = vpop.f32.mrf.mxu0
        %v586 = vadd.f32 0.0, %v585
        %v587 = vpop.f32.mrf.mxu0
        %588 = vdwg.mxu0
        %v589 = vadd.f32 %v479, %v575
        %v590 = vadd.f32 %v482, %v578
        %v591 = vadd.f32 %v487, %v583
        %v592 = vadd.f32 %v490, %v586
        %v593 = vld [vmem:[%s2] sm:$0x1]
        %v595 = vlaneseq
        %v596 = vshrl.u32 %v595, 7
        %v597 = vsub.s32 0, %v596
        %v598 = vrot.slane %v593, %v597
        %v600 = vadd.f32 %v589, %v598
        %v601 = vadd.f32 %v590, %v598
        %v602 = vadd.f32 %v591, %v598
        %v603 = vadd.f32 %v592, %v598
        %v604 = vmax.f32 %v600, 0.0
        %v605 = vmax.f32 %v601, 0.0
        %v606 = vmax.f32 %v602, 0.0
        %v607 = vmax.f32 %v603, 0.0
        %v608 = vld [vmem:[%s5] sm:$0xff]
        %v609 = vld [vmem:[%s5 + $0x8] sm:$0xff]
        %v610 = vld [vmem:[%s5 + $0x10] sm:$0xff]
        %v611 = vld [vmem:[%s5 + $0x18] sm:$0x3f]
        %613 = vset.pattern.permute.xlu0 0
        %614 = vperm.xlu0 %613, %v608
        %v615 = vpop.permute.xlu0 %614
        %618 = vset.pattern.permute.xlu0 0
        %619 = vperm.xlu0 %618, %v609
        %v620 = vpop.permute.xlu0 %619
        %623 = vset.pattern.permute.xlu0 0
        %624 = vperm.xlu0 %623, %v610
        %v625 = vpop.permute.xlu0 %624
        %628 = vset.pattern.permute.xlu0 0
        %629 = vperm.xlu0 %628, %v611
        %v630 = vpop.permute.xlu0 %629
        %v632 = vmul.f32 %v604, %v615
        %v633 = vmul.f32 %v605, %v620
        %v634 = vmul.f32 %v606, %v625
        %v635 = vmul.f32 %v607, %v630
        %vm636 = vcmask 1040384
        %vm637 = vsmask.f32 256
        %vm638 = vmand %vm636, %vm637
        %v639 = vld [vmem:[#allocation2] sm:$0x1]
        %v640 = vsel %vm638, 0, %v639
        %641 = vst [vmem:[#allocation2] sm:$0x1] %v640
        %vm642 = vcmask 1043459
        %vm643 = vsmask.f32 7950
        %vm644 = vmand %vm642, %vm643
        %v645 = vld [vmem:[#allocation2 + $0xc] sm:$0x8]
        %v646 = vsel %vm644, 0, %v645
        %647 = vst [vmem:[#allocation2 + $0xc] sm:$0x8] %v646
        %v648 = vpack.c.bf16 %v633, %v632
        %v649 = vpack.c.bf16 %v635, %v634
        %v652 = vunpack.c.l.b16 %v648
        %v653 = vunpack.c.h.b16 %v648
        %v654 = vunpack.c.l.b16 %v649
        %v655 = vunpack.c.h.b16 %v649
        %v656 = vpack.c.b16 %v652, %v652
        %v657 = vpack.c.b16 %v653, %v653
        %v658 = vpack.c.b16 %v654, %v654
        %v659 = vpack.c.b16 %v655, %v655
        %vm660 = vsmask.f32 4368
        %vm661 = vmor %vm637, %vm660
        %v663 = vshrl.u32 %v656, 16
        %v665 = vrot.slane %v663, 7
        %v666 = vshll.u32 %v656, 16
        %v668 = vor.u32 %v665, %v666
        %v669 = vrot.slane %v665, 4
        %v671 = vshrl.u32 %v657, 16
        %v673 = vrot.slane %v671, 7
        %v674 = vshll.u32 %v657, 16
        %v676 = vor.u32 %v673, %v674
        %v677 = vsel %vm661, %v669, %v676
        %v678 = vrot.slane %v673, 4
        %v680 = vshrl.u32 %v658, 16
        %v682 = vrot.slane %v680, 7
        %v683 = vshll.u32 %v658, 16
        %v685 = vor.u32 %v682, %v683
        %v686 = vsel %vm661, %v678, %v685
        %v687 = vrot.slane %v682, 4
        %v689 = vshrl.u32 %v659, 16
        %v691 = vrot.slane %v689, 7
        %v692 = vshll.u32 %v659, 16
        %v694 = vor.u32 %v691, %v692
        %v695 = vsel %vm661, %v687, %v694
        %vm700 = vcmask 1043456
        %vm701 = vsmask.f32 7938
        %vm702 = vmand %vm700, %vm701
        %v703 = vld [vmem:[#allocation2] sm:$0xf]
        %v704 = vsel %vm702, %v668, %v703
        %705 = vst [vmem:[#allocation2] sm:$0xf] %v704
        %706 = vst [vmem:[#allocation2 + $0x4] sm:$0xf] %v677
        %707 = vst [vmem:[#allocation2 + $0x8] sm:$0xf] %v686
        %vm708 = vsmask.f32 3328
        %vm709 = vmand %vm700, %vm708
        %v710 = vld [vmem:[#allocation2 + $0xc] sm:$0xf]
        %v711 = vsel %vm709, %v695, %v710
        %712 = vst [vmem:[#allocation2 + $0xc] sm:$0xf] %v711
        %v713 = vld [vmem:[#allocation2] sm:$0xf]
        %v714 = vld [vmem:[#allocation2 + $0x4] sm:$0xf]
        %v715 = vld [vmem:[#allocation2 + $0x8] sm:$0xf]
        %v716 = vld [vmem:[#allocation2 + $0xc] sm:$0x7]
        %v717 = vld [vmem:[#allocation6] sm:$0xf]
        %v718 = vld [vmem:[#allocation6 + $0x4] sm:$0xf]
        %v719 = vld [vmem:[#allocation6 + $0x8] sm:$0xf]
        %v720 = vld [vmem:[#allocation6 + $0xc] sm:$0xf]
        %v721 = vld [vmem:[#allocation6 + $0x10] sm:$0xf]
        %v722 = vld [vmem:[#allocation6 + $0x14] sm:$0xf]
        %v723 = vld [vmem:[#allocation6 + $0x18] sm:$0xf]
        %v724 = vld [vmem:[#allocation6 + $0x1c] sm:$0xf]
        %v725 = vld [vmem:[#allocation6 + $0x20] sm:$0xf]
        %v726 = vld [vmem:[#allocation6 + $0x24] sm:$0xf]
        %v727 = vld [vmem:[#allocation6 + $0x28] sm:$0xf]
        %v728 = vld [vmem:[#allocation6 + $0x2c] sm:$0xf]
        %v729 = vld [vmem:[#allocation6 + $0x30] sm:$0xf]
        %v730 = vld [vmem:[#allocation6 + $0x34] sm:$0xf]
        %v731 = vld [vmem:[#allocation6 + $0x38] sm:$0xf]
        %v732 = vld [vmem:[#allocation6 + $0x3c] sm:$0xf]
        %v733 = vld [vmem:[#allocation2 + $0xc] sm:$0xf]
        %s734 = scalar_lea.vmem [#allocation6], 64
        %v735 = vld [vmem:[%s734] sm:$0xf]
        %v736 = vld [vmem:[%s734 + $0x4] sm:$0xf]
        %v737 = vld [vmem:[%s734 + $0x8] sm:$0xf]
        %v738 = vld [vmem:[%s734 + $0xc] sm:$0xf]
        %v739 = vld [vmem:[%s734 + $0x10] sm:$0xf]
        %v740 = vld [vmem:[%s734 + $0x14] sm:$0xf]
        %v741 = vld [vmem:[%s734 + $0x18] sm:$0xf]
        %v742 = vld [vmem:[%s734 + $0x1c] sm:$0xf]
        %v743 = vld [vmem:[%s734 + $0x20] sm:$0xf]
        %v744 = vld [vmem:[%s734 + $0x24] sm:$0xf]
        %v745 = vld [vmem:[%s734 + $0x28] sm:$0xf]
        %v746 = vld [vmem:[%s734 + $0x2c] sm:$0xf]
        %v747 = vld [vmem:[%s734 + $0x30] sm:$0xf]
        %v748 = vld [vmem:[%s734 + $0x34] sm:$0xf]
        %v749 = vld [vmem:[%s734 + $0x38] sm:$0xf]
        %v750 = vld [vmem:[%s734 + $0x3c] sm:$0xf]
        %v755 = vunpack.c.l.b16 %v713
        %v756 = vunpack.c.l.b16 %v714
        %v757 = vunpack.c.l.b16 %v715
        %v758 = vunpack.c.l.b16 %v733
        %v759 = vpack.c.b16 %v756, %v755
        %v760 = vpack.c.b16 %v758, %v757
        %v762 = vshrl.u32 %v759, 16
        %v764 = vshll.u32 %v759, 16
        %v766 = vrot.slane %v764, 1
        %v767 = vor.u32 %v762, %v766
        %v769 = vshll.u32 %v760, 16
        %v771 = vrot.slane %v769, 1
        %v772 = vsel %vm316, %v767, %v771
        %v773 = vshrl.u32 %v760, 16
        %v775 = vor.u32 %v773, %v771
        %v794 = vunpack.c.l.b16 %v735
        %v795 = vunpack.c.l.b16 %v736
        %v796 = vunpack.c.l.b16 %v737
        %v797 = vunpack.c.l.b16 %v738
        %v798 = vunpack.c.l.b16 %v739
        %v799 = vunpack.c.l.b16 %v740
        %v800 = vunpack.c.l.b16 %v741
        %v801 = vunpack.c.l.b16 %v742
        %v802 = vunpack.c.l.b16 %v743
        %v803 = vunpack.c.l.b16 %v744
        %v804 = vunpack.c.l.b16 %v745
        %v805 = vunpack.c.l.b16 %v746
        %v806 = vunpack.c.l.b16 %v747
        %v807 = vunpack.c.l.b16 %v748
        %v808 = vunpack.c.l.b16 %v749
        %v809 = vunpack.c.l.b16 %v750
        %v810 = vpack.c.b16 %v795, %v794
        %v811 = vpack.c.b16 %v797, %v796
        %v812 = vpack.c.b16 %v799, %v798
        %v813 = vpack.c.b16 %v801, %v800
        %v814 = vpack.c.b16 %v803, %v802
        %v815 = vpack.c.b16 %v805, %v804
        %v816 = vpack.c.b16 %v807, %v806
        %v817 = vpack.c.b16 %v809, %v808
        %826 = vmatprep.subr.bf16.mxu0 0
        %827 = vmatpush1.bf16.msra.mxu0 %v817
        %828 = vmatprep.subr.bf16.mxu0 0
        %829 = vmatpush1.bf16.msra.mxu0 %v816
        %830 = vmatprep.subr.bf16.mxu0 0
        %831 = vmatpush1.bf16.msra.mxu0 %v815
        %832 = vmatprep.subr.bf16.mxu0 0
        %833 = vmatpush1.bf16.msra.mxu0 %v814
        %834 = vmatprep.subr.bf16.mxu0 0
        %835 = vmatpush1.bf16.msra.mxu0 %v813
        %836 = vmatprep.subr.bf16.mxu0 0
        %837 = vmatpush1.bf16.msra.mxu0 %v812
        %838 = vmatprep.subr.bf16.mxu0 0
        %839 = vmatpush1.bf16.msra.mxu0 %v811
        %840 = vmatprep.subr.bf16.mxu0 0
        %841 = vmatpush1.bf16.msra.mxu0 %v810
        %842 = vmatprep.subr.bf16.mxu0 0
        %843 = vmatpush2.bf16.msra.mxu0 0
        %844 = vmatprep.subr.bf16.mxu0 0
        %845 = vmatpush2.bf16.msra.mxu0 0
        %846 = vmatprep.subr.bf16.mxu0 0
        %847 = vmatpush2.bf16.msra.mxu0 0
        %848 = vmatprep.subr.bf16.mxu0 0
        %849 = vmatpush2.bf16.msra.mxu0 0
        %850 = vmatprep.subr.bf16.mxu0 0
        %851 = vmatpush2.bf16.msra.mxu0 0
        %852 = vmatprep.subr.bf16.mxu0 0
        %853 = vmatpush2.bf16.msra.mxu0 0
        %854 = vmatprep.subr.bf16.mxu0 0
        %855 = vmatpush2.bf16.msra.mxu0 0
        %856 = vmatprep.subr.bf16.mxu0 0
        %857 = vmatpush2.bf16.msra.mxu0 0
        %858 = vmatprep.mubr.bf16.mxu0 0
        %859 = vmatmul.mubr.bf16.gmra.mxu0 %v772
        %v860 = vpop.f32.mrf.mxu0
        %v861 = vadd.f32 0.0, %v860
        %v862 = vpop.f32.mrf.mxu0
        %v863 = vpop.f32.mrf.mxu0
        %v864 = vadd.f32 0.0, %v863
        %v865 = vpop.f32.mrf.mxu0
        %866 = vmatprep.mubr.bf16.mxu0 0
        %867 = vmatmul.mubr.bf16.gmra.mxu0 %v775
        %v868 = vpop.f32.mrf.mxu0
        %v869 = vadd.f32 0.0, %v868
        %v870 = vpop.f32.mrf.mxu0
        %v871 = vpop.f32.mrf.mxu0
        %v872 = vadd.f32 0.0, %v871
        %v873 = vpop.f32.mrf.mxu0
        %874 = vdwg.mxu0
        %v876 = vunpack.c.l.b16 %v716
        %v877 = vpack.c.b16 %v876, %v757
        %v896 = vunpack.c.l.b16 %v717
        %v897 = vunpack.c.l.b16 %v718
        %v898 = vunpack.c.l.b16 %v719
        %v899 = vunpack.c.l.b16 %v720
        %v900 = vunpack.c.l.b16 %v721
        %v901 = vunpack.c.l.b16 %v722
        %v902 = vunpack.c.l.b16 %v723
        %v903 = vunpack.c.l.b16 %v724
        %v904 = vunpack.c.l.b16 %v725
        %v905 = vunpack.c.l.b16 %v726
        %v906 = vunpack.c.l.b16 %v727
        %v907 = vunpack.c.l.b16 %v728
        %v908 = vunpack.c.l.b16 %v729
        %v909 = vunpack.c.l.b16 %v730
        %v910 = vunpack.c.l.b16 %v731
        %v911 = vunpack.c.l.b16 %v732
        %v912 = vpack.c.b16 %v897, %v896
        %v913 = vpack.c.b16 %v899, %v898
        %v914 = vpack.c.b16 %v901, %v900
        %v915 = vpack.c.b16 %v903, %v902
        %v916 = vpack.c.b16 %v905, %v904
        %v917 = vpack.c.b16 %v907, %v906
        %v918 = vpack.c.b16 %v909, %v908
        %v919 = vpack.c.b16 %v911, %v910
        %928 = vmatprep.subr.bf16.mxu0 0
        %929 = vmatpush1.bf16.msra.mxu0 %v919
        %930 = vmatprep.subr.bf16.mxu0 0
        %931 = vmatpush1.bf16.msra.mxu0 %v918
        %932 = vmatprep.subr.bf16.mxu0 0
        %933 = vmatpush1.bf16.msra.mxu0 %v917
        %934 = vmatprep.subr.bf16.mxu0 0
        %935 = vmatpush1.bf16.msra.mxu0 %v916
        %936 = vmatprep.subr.bf16.mxu0 0
        %937 = vmatpush1.bf16.msra.mxu0 %v915
        %938 = vmatprep.subr.bf16.mxu0 0
        %939 = vmatpush1.bf16.msra.mxu0 %v914
        %940 = vmatprep.subr.bf16.mxu0 0
        %941 = vmatpush1.bf16.msra.mxu0 %v913
        %942 = vmatprep.subr.bf16.mxu0 0
        %943 = vmatpush1.bf16.msra.mxu0 %v912
        %944 = vmatprep.subr.bf16.mxu0 0
        %945 = vmatpush2.bf16.msra.mxu0 0
        %946 = vmatprep.subr.bf16.mxu0 0
        %947 = vmatpush2.bf16.msra.mxu0 0
        %948 = vmatprep.subr.bf16.mxu0 0
        %949 = vmatpush2.bf16.msra.mxu0 0
        %950 = vmatprep.subr.bf16.mxu0 0
        %951 = vmatpush2.bf16.msra.mxu0 0
        %952 = vmatprep.subr.bf16.mxu0 0
        %953 = vmatpush2.bf16.msra.mxu0 0
        %954 = vmatprep.subr.bf16.mxu0 0
        %955 = vmatpush2.bf16.msra.mxu0 0
        %956 = vmatprep.subr.bf16.mxu0 0
        %957 = vmatpush2.bf16.msra.mxu0 0
        %958 = vmatprep.subr.bf16.mxu0 0
        %959 = vmatpush2.bf16.msra.mxu0 0
        %960 = vmatprep.mubr.bf16.mxu0 0
        %961 = vmatmul.mubr.bf16.gmra.mxu0 %v759
        %v962 = vpop.f32.mrf.mxu0
        %v963 = vadd.f32 %v861, %v962
        %v964 = vpop.f32.mrf.mxu0
        %v965 = vpop.f32.mrf.mxu0
        %v966 = vadd.f32 %v864, %v965
        %v967 = vpop.f32.mrf.mxu0
        %968 = vmatprep.mubr.bf16.mxu0 0
        %969 = vmatmul.mubr.bf16.gmra.mxu0 %v877
        %v970 = vpop.f32.mrf.mxu0
        %v971 = vadd.f32 %v869, %v970
        %v972 = vpop.f32.mrf.mxu0
        %v973 = vpop.f32.mrf.mxu0
        %v974 = vadd.f32 %v872, %v973
        %v975 = vpop.f32.mrf.mxu0
        %976 = vdwg.mxu0
        %v977 = vld [vmem:[#allocation2] sm:$0xe]
        %s978 = scalar_lea.vmem [#allocation6], 128
        %v979 = vld [vmem:[%s978] sm:$0xf]
        %v980 = vld [vmem:[%s978 + $0x4] sm:$0xf]
        %v981 = vld [vmem:[%s978 + $0x8] sm:$0xf]
        %v982 = vld [vmem:[%s978 + $0xc] sm:$0xf]
        %v983 = vld [vmem:[%s978 + $0x10] sm:$0xf]
        %v984 = vld [vmem:[%s978 + $0x14] sm:$0xf]
        %v985 = vld [vmem:[%s978 + $0x18] sm:$0xf]
        %v986 = vld [vmem:[%s978 + $0x1c] sm:$0xf]
        %v987 = vld [vmem:[%s978 + $0x20] sm:$0xf]
        %v988 = vld [vmem:[%s978 + $0x24] sm:$0xf]
        %v989 = vld [vmem:[%s978 + $0x28] sm:$0xf]
        %v990 = vld [vmem:[%s978 + $0x2c] sm:$0xf]
        %v991 = vld [vmem:[%s978 + $0x30] sm:$0xf]
        %v992 = vld [vmem:[%s978 + $0x34] sm:$0xf]
        %v993 = vld [vmem:[%s978 + $0x38] sm:$0xf]
        %v994 = vld [vmem:[%s978 + $0x3c] sm:$0xf]
        %v996 = vunpack.c.l.b16 %v977
        %v997 = vpack.c.b16 %v756, %v996
        %v998 = vrot.slane %v997, 1
        %v999 = vrot.slane %v760, 1
        %v1000 = vsel %vm506, %v998, %v999
        %v1019 = vunpack.c.l.b16 %v979
        %v1020 = vunpack.c.l.b16 %v980
        %v1021 = vunpack.c.l.b16 %v981
        %v1022 = vunpack.c.l.b16 %v982
        %v1023 = vunpack.c.l.b16 %v983
        %v1024 = vunpack.c.l.b16 %v984
        %v1025 = vunpack.c.l.b16 %v985
        %v1026 = vunpack.c.l.b16 %v986
        %v1027 = vunpack.c.l.b16 %v987
        %v1028 = vunpack.c.l.b16 %v988
        %v1029 = vunpack.c.l.b16 %v989
        %v1030 = vunpack.c.l.b16 %v990
        %v1031 = vunpack.c.l.b16 %v991
        %v1032 = vunpack.c.l.b16 %v992
        %v1033 = vunpack.c.l.b16 %v993
        %v1034 = vunpack.c.l.b16 %v994
        %v1035 = vpack.c.b16 %v1020, %v1019
        %v1036 = vpack.c.b16 %v1022, %v1021
        %v1037 = vpack.c.b16 %v1024, %v1023
        %v1038 = vpack.c.b16 %v1026, %v1025
        %v1039 = vpack.c.b16 %v1028, %v1027
        %v1040 = vpack.c.b16 %v1030, %v1029
        %v1041 = vpack.c.b16 %v1032, %v1031
        %v1042 = vpack.c.b16 %v1034, %v1033
        %1051 = vmatprep.subr.bf16.mxu0 0
        %1052 = vmatpush1.bf16.msra.mxu0 %v1042
        %1053 = vmatprep.subr.bf16.mxu0 0
        %1054 = vmatpush1.bf16.msra.mxu0 %v1041
        %1055 = vmatprep.subr.bf16.mxu0 0
        %1056 = vmatpush1.bf16.msra.mxu0 %v1040
        %1057 = vmatprep.subr.bf16.mxu0 0
        %1058 = vmatpush1.bf16.msra.mxu0 %v1039
        %1059 = vmatprep.subr.bf16.mxu0 0
        %1060 = vmatpush1.bf16.msra.mxu0 %v1038
        %1061 = vmatprep.subr.bf16.mxu0 0
        %1062 = vmatpush1.bf16.msra.mxu0 %v1037
        %1063 = vmatprep.subr.bf16.mxu0 0
        %1064 = vmatpush1.bf16.msra.mxu0 %v1036
        %1065 = vmatprep.subr.bf16.mxu0 0
        %1066 = vmatpush1.bf16.msra.mxu0 %v1035
        %1067 = vmatprep.subr.bf16.mxu0 0
        %1068 = vmatpush2.bf16.msra.mxu0 0
        %1069 = vmatprep.subr.bf16.mxu0 0
        %1070 = vmatpush2.bf16.msra.mxu0 0
        %1071 = vmatprep.subr.bf16.mxu0 0
        %1072 = vmatpush2.bf16.msra.mxu0 0
        %1073 = vmatprep.subr.bf16.mxu0 0
        %1074 = vmatpush2.bf16.msra.mxu0 0
        %1075 = vmatprep.subr.bf16.mxu0 0
        %1076 = vmatpush2.bf16.msra.mxu0 0
        %1077 = vmatprep.subr.bf16.mxu0 0
        %1078 = vmatpush2.bf16.msra.mxu0 0
        %1079 = vmatprep.subr.bf16.mxu0 0
        %1080 = vmatpush2.bf16.msra.mxu0 0
        %1081 = vmatprep.subr.bf16.mxu0 0
        %1082 = vmatpush2.bf16.msra.mxu0 0
        %1083 = vmatprep.mubr.bf16.mxu0 0
        %1084 = vmatmul.mubr.bf16.gmra.mxu0 %v1000
        %v1085 = vpop.f32.mrf.mxu0
        %v1086 = vadd.f32 0.0, %v1085
        %v1087 = vpop.f32.mrf.mxu0
        %v1088 = vpop.f32.mrf.mxu0
        %v1089 = vadd.f32 0.0, %v1088
        %v1090 = vpop.f32.mrf.mxu0
        %1091 = vmatprep.mubr.bf16.mxu0 0
        %1092 = vmatmul.mubr.bf16.gmra.mxu0 %v999
        %v1093 = vpop.f32.mrf.mxu0
        %v1094 = vadd.f32 0.0, %v1093
        %v1095 = vpop.f32.mrf.mxu0
        %v1096 = vpop.f32.mrf.mxu0
        %v1097 = vadd.f32 0.0, %v1096
        %v1098 = vpop.f32.mrf.mxu0
        %1099 = vdwg.mxu0
        %v1100 = vadd.f32 %v963, %v1086
        %v1101 = vadd.f32 %v966, %v1089
        %v1102 = vadd.f32 %v971, %v1094
        %v1103 = vadd.f32 %v974, %v1097
        %v1104 = vld [vmem:[%s4] sm:$0x1]
        %v1106 = vlaneseq
        %v1107 = vshrl.u32 %v1106, 7
        %v1108 = vsub.s32 0, %v1107
        %v1109 = vrot.slane %v1104, %v1108
        %v1111 = vadd.f32 %v1100, %v1109
        %v1112 = vadd.f32 %v1101, %v1109
        %v1113 = vadd.f32 %v1102, %v1109
        %v1114 = vadd.f32 %v1103, %v1109
        %v1115 = vmax.f32 %v1111, 0.0
        %v1116 = vmax.f32 %v1112, 0.0
        %v1117 = vmax.f32 %v1113, 0.0
        %v1118 = vmax.f32 %v1114, 0.0
        %1119 = vst [vmem:[%s275] sm:$0xff] %v1115
        %1120 = vst [vmem:[%s275 + $0x8] sm:$0xff] %v1116
        %1121 = vst [vmem:[%s275 + $0x10] sm:$0xff] %v1117
        %1122 = vst [vmem:[%s275 + $0x18] sm:$0x3f] %v1118
        %1123 = vst [vmem:[%s275 + $0x1e] sm:$0x3] 0.0
        %s1124 = sand.u32 %s161, 1
        %s1125 = scalar_lea.sflag [#allocation5], %s1124
        %s1126 = sand.u32 %s161, 1
        %s1127 = smul.addr %s1126, 32
        %s1128 = scalar_lea.vmem [#allocation8], %s1127
        // Predicated region
        $region53: #{tpu_custom_call.1} parent=43 // pred_check
          %p1129 = pneg %p171
        $region54: #{tpu_custom_call.1} parent=43 // pred_check_branch
          %1131 = sbr.rel (%p1129) target = $region56
        $region55: #{tpu_custom_call.1} parent=43 // pred_region
          %s1132 = smul.u32 4, %s22
          %s1134 = ssub.s32 512, 512
          %1135 = vsyncadd %s1125, %s1134
          %s1136 = smul.addr %s1132, 128
          %s1137 = scalar_lea.hbm %s6, %s1136
          %s1138 = sshll.u32 %s1128, 4
          %s1139 = int_to_ptr.vmem [resolvable:$true] %s1138
          %1144 = dma.vmem_to_hbm [thread:$0]  %s1139, 512, %s1137, %s1125, 128, 128, 8
        $region56: #{tpu_custom_call.1} parent=43 // pred_fallthru
          _
      $region44: #{tpu_custom_call.1} parent=5 // pred_fallthru
        _
      %p1145 = scmp.le.s32.totalorder 2, %s17
      // Predicated region
      $region57: #{tpu_custom_call.1} parent=5 // pred_check
        %p1146 = pneg %p1145
      $region58: #{tpu_custom_call.1} parent=5 // pred_check_branch
        %1148 = sbr.rel (%p1146) target = $region60
      $region59: #{tpu_custom_call.1} parent=5 // pred_region
        %s1149 = ssub.s32 %s17, 2
        // Predicated region
        $region61: #{tpu_custom_call.1} parent=59 // pred_check
          %p1150 = pneg %p177
        $region62: #{tpu_custom_call.1} parent=59 // pred_check_branch
          %1152 = sbr.rel (%p1150) target = $region64
        $region63: #{tpu_custom_call.1} parent=59 // pred_region
          %s1153 = sand.u32 %s162, 1
          %s1154 = scalar_lea.sflag [#allocation5], %s1153
          %s1155 = sand.u32 %s162, 1
          %s1156 = smul.addr %s1155, 32
          %s1157 = scalar_lea.vmem [#allocation8], %s1156
          %1158 = dma.done %s1154, 512
        $region64: #{tpu_custom_call.1} parent=59 // pred_fallthru
          _
      $region60: #{tpu_custom_call.1} parent=5 // pred_fallthru
        _
    $region6: #{tpu_custom_call.1} parent=1 // loop_footer
      %s21 = sadd.s32 1, %s17
    $region7: #{tpu_custom_call.1} parent=1 // loop_footer_branch
      %16 = sbr.rel target = $region3
    $region8: #{tpu_custom_call.1} parent=1 // loop_exit
      _
    %1159 = vsyncpa [#allocation4], 1
    %s1160 = scalar_lea.sflag [#allocation4], 1
    %1161 = vsyncpa %s1160, 1
    %1162 = vsyncpa [#allocation7], 1
    %1163 = vsyncpa [#allocation5], 1
    %s1164 = scalar_lea.sflag [#allocation5], 1
    %1165 = vsyncpa %s1164, 1

</llo_original>
